<compile_context>
chip_gen: v5e
topology: v5e:2x2
jax: 0.10.0
libtpu: 0.0.40
codegen_flags: <defaults>
</compile_context>

<pallas_src>
import jax
import jax.numpy as jnp
from jax.experimental import pallas as pl
from jax.experimental.pallas import tpu as pltpu


# ----------------------------------------------------------------------------
# Kernel body: one (TB, IMG) batch tile per grid step, weights VMEM-resident.
# ----------------------------------------------------------------------------
def _encoder_kernel(x_ref, w1_ref, b1_ref, w2_ref, b2_ref, mu_ref):
    # Linear 1 (MXU, f32 accumulation) + bias + ReLU (VPU).
    h = jnp.dot(x_ref[...], w1_ref[...], preferred_element_type=jnp.float32)
    h = jnp.maximum(h + b1_ref[...], 0.0)

    # Linear 2 (MXU, f32 accumulation) + bias; narrow (Z-lane) store.
    mu = jnp.dot(h.astype(w2_ref.dtype), w2_ref[...],
                 preferred_element_type=jnp.float32)
    mu_ref[...] = (mu + b2_ref[...]).astype(mu_ref.dtype)


# ----------------------------------------------------------------------------
# Wrapper.
# ----------------------------------------------------------------------------
def _round_up(n, m):
    return ((n + m - 1) // m) * m


def encoder_forward(x, w1, b1, w2, b2, *, block_b=512, min_pallas_batch=64,
                    compute_dtype=jnp.bfloat16):
    """Pallas-backed forward for the VAE Encoder.

    x  : [B, IMG]
    w1 : [IMG, H], b1: [1, H] or [H]
    w2 : [H, Z],   b2: [1, Z] or [Z]
    returns mu: [B, Z] float32
    """
    B, IMG = x.shape
    H = w1.shape[1]
    Z = w2.shape[1]
    assert w1.shape[0] == IMG and w2.shape[0] == H

    b1 = jnp.asarray(b1, jnp.float32).reshape(1, H)
    b2 = jnp.asarray(b2, jnp.float32).reshape(1, Z)

    # Tiny batch: launch overhead dominates, plain XLA is as fast or faster.
    if B < min_pallas_batch:
        h = jnp.maximum(
            x.astype(jnp.float32) @ w1.astype(jnp.float32) + b1, 0.0)
        return h @ w2.astype(jnp.float32) + b2

    # bf16 streams: halves x DMA bytes (dominant stream) and runs the MXU at
    # its native bf16 rate; accumulation stays f32 inside the kernel.
    x_c = x.astype(compute_dtype)
    w1_c = w1.astype(compute_dtype)
    w2_c = w2.astype(compute_dtype)
    itemsize_c = jnp.dtype(compute_dtype).itemsize

    # Batch tiling: even number of tiles (>= 2) so both v7x TensorCores get
    # work; tile rows sublane-aligned (multiple of 8).  B itself is NOT padded;
    # a partial trailing block is handled by Pallas (clipped writeback).
    n_tiles = _round_up(max(2, pl.cdiv(B, block_b)), 2)
    TB = _round_up(pl.cdiv(B, n_tiles), 8)
    grid_b = pl.cdiv(B, TB)

    # Scoped-VMEM headroom only if the double-buffered tiles get large
    # (matters for very large TB on v5e's 16 MiB default).
    vmem_needed = (2 * TB * IMG * itemsize_c          # x tiles (double-buffered)
                   + 2 * TB * Z * 4                   # out tiles
                   + 2 * (IMG * H + H * Z) * itemsize_c  # weights
                   + 2 * (H + Z) * 4)                 # biases
    compiler_kwargs = {}
    if vmem_needed > 12 * 1024 * 1024:
        compiler_kwargs["vmem_limit_bytes"] = min(
            _round_up(int(vmem_needed * 3 // 2), 1 << 20), 64 * 1024 * 1024)

    cost = pl.CostEstimate(
        flops=2 * B * (IMG * H + H * Z),
        transcendentals=0,
        bytes_accessed=(B * IMG * itemsize_c + B * Z * 4
                        + (IMG * H + H * Z) * itemsize_c + (H + Z) * 4))

    out = pl.pallas_call(
        _encoder_kernel,
        out_shape=jax.ShapeDtypeStruct((B, Z), jnp.float32),
        grid_spec=pl.GridSpec(
            grid=(grid_b,),
            in_specs=[
                # activations stream over the batch grid axis
                pl.BlockSpec((TB, IMG), lambda i: (i, 0)),
                # weights / biases: constant block index -> VMEM-resident
                pl.BlockSpec((IMG, H), lambda i: (0, 0)),
                pl.BlockSpec((1, H), lambda i: (0, 0)),
                pl.BlockSpec((H, Z), lambda i: (0, 0)),
                pl.BlockSpec((1, Z), lambda i: (0, 0)),
            ],
            out_specs=pl.BlockSpec((TB, Z), lambda i: (i, 0)),
        ),
        compiler_params=pltpu.CompilerParams(
            dimension_semantics=("parallel",),       # megacore split on v7x
            **compiler_kwargs),
        cost_estimate=cost,
    )(x_c, w1_c, b1, w2_c, b2)

    return out


# ----------------------------------------------------------------------------
# Deterministic nn.Linear-style init (uniform +-1/sqrt(fan_in)).
# ----------------------------------------------------------------------------
def init_encoder_params(key, image_size, hidden_dim, z_dim):
    k1, k2, k3, k4 = jax.random.split(key, 4)
    bound1 = 1.0 / (image_size ** 0.5)
    bound2 = 1.0 / (hidden_dim ** 0.5)
    w1 = jax.random.uniform(k1, (image_size, hidden_dim), jnp.float32, -bound1, bound1)
    b1 = jax.random.uniform(k2, (1, hidden_dim), jnp.float32, -bound1, bound1)
    w2 = jax.random.uniform(k3, (hidden_dim, z_dim), jnp.float32, -bound2, bound2)
    b2 = jax.random.uniform(k4, (1, z_dim), jnp.float32, -bound2, bound2)
    return w1, b1, w2, b2


if __name__ == "__main__":
    # image_size = 16*16 = 256 (flattened), hidden_dim = 128, z_dim = 8,
    # batch = 512 -> two batch tiles of 256 rows (even grid for v7x megacore).
    B, IMG, H, Z = 512, 16 * 16, 128, 8

    key = jax.random.PRNGKey(0)
    kx, kp = jax.random.split(key)
    x = jax.random.normal(kx, (B, IMG), dtype=jnp.float32)
    w1, b1, w2, b2 = init_encoder_params(kp, IMG, H, Z)

    # Reference in plain JAX (same math as the PyTorch module), high precision.
    hp = jax.lax.Precision.HIGHEST
    ref = jnp.maximum(jnp.dot(x, w1, precision=hp) + b1, 0.0)
    ref = jnp.dot(ref, w2, precision=hp) + b2

    # 1) Default bf16 compute path (MXU-native, f32 accumulation).
    out_bf16 = jax.block_until_ready(encoder_forward(x, w1, b1, w2, b2))
    assert out_bf16.shape == (B, Z)
    assert jnp.allclose(out_bf16, ref, atol=5e-2, rtol=5e-2), "bf16 mismatch"

    # 2) f32 compute path (tighter tolerance).
    out_f32 = jax.block_until_ready(
        encoder_forward(x, w1, b1, w2, b2, compute_dtype=jnp.float32))
    assert out_f32.shape == (B, Z)
    assert jnp.allclose(out_f32, ref, atol=1e-3, rtol=1e-3), "f32 mismatch"

    # 3) Ragged batch (B not a multiple of the tile): exercises the partial
    #    trailing block — no wrapper-side pad of x, no post-kernel slice.
    Br = 500
    out_r = jax.block_until_ready(encoder_forward(x[:Br], w1, b1, w2, b2))
    assert out_r.shape == (Br, Z)
    assert jnp.allclose(out_r, ref[:Br], atol=5e-2, rtol=5e-2), "ragged mismatch"

    # 4) Tiny batch falls back to plain XLA.
    out_t = jax.block_until_ready(encoder_forward(x[:16], w1, b1, w2, b2))
    assert jnp.allclose(out_t, ref[:16], atol=1e-3, rtol=1e-3), "tiny mismatch"

    print("KERNEL_OK")
</pallas_src>

<mosaic_0001>
module attributes {stable_mosaic.version = 11 : i64} {
  func.func @_encoder_kernel(%arg0: i32, %arg1: memref<256x256xbf16, #tpu.memory_space<vmem>>, %arg2: memref<256x128xbf16, #tpu.memory_space<vmem>>, %arg3: memref<1x128xf32, #tpu.memory_space<vmem>>, %arg4: memref<128x8xbf16, #tpu.memory_space<vmem>>, %arg5: memref<1x8xf32, #tpu.memory_space<vmem>>, %arg6: memref<256x8xf32, #tpu.memory_space<vmem>>) attributes {dimension_semantics = [#tpu.dimension_semantics<parallel>], iteration_bounds = array<i64: 2>, scalar_prefetch = 0 : i64, scratch_operands = 0 : i64, tpu.core_type = #tpu.core_type<tc>, window_params = [{transform_indices = @transform_0, window_bounds = array<i64: 256, 256>}, {pipeline_mode = #tpu.pipeline_mode<synchronous>, transform_indices = @transform_1, window_bounds = array<i64: 256, 128>}, {pipeline_mode = #tpu.pipeline_mode<synchronous>, transform_indices = @transform_2, window_bounds = array<i64: 1, 128>}, {pipeline_mode = #tpu.pipeline_mode<synchronous>, transform_indices = @transform_3, window_bounds = array<i64: 128, 8>}, {pipeline_mode = #tpu.pipeline_mode<synchronous>, transform_indices = @transform_4, window_bounds = array<i64: 1, 8>}, {transform_indices = @transform_5, window_bounds = array<i64: 256, 8>}]} {
    %c0 = arith.constant 0 : index
    %c0_0 = arith.constant 0 : index
    %0 = vector.load %arg1[%c0, %c0_0] : memref<256x256xbf16, #tpu.memory_space<vmem>>, vector<256x256xbf16>
    %c0_1 = arith.constant 0 : index
    %c0_2 = arith.constant 0 : index
    %1 = vector.load %arg2[%c0_1, %c0_2] : memref<256x128xbf16, #tpu.memory_space<vmem>>, vector<256x128xbf16>
    %cst = arith.constant dense<0.000000e+00> : vector<256x128xf32>
    %2 = tpu.matmul %0, %1, %cst {dimension_numbers = #tpu.dot_dimension_numbers<[1], [0], [0], [1], [0, 0, 1, 1], [], []>} : vector<256x256xbf16>, vector<256x128xbf16>, vector<256x128xf32> -> vector<256x128xf32>
    %c0_3 = arith.constant 0 : index
    %c0_4 = arith.constant 0 : index
    %3 = vector.load %arg3[%c0_3, %c0_4] : memref<1x128xf32, #tpu.memory_space<vmem>>, vector<1x128xf32>
    %4 = vector.broadcast %3 : vector<1x128xf32> to vector<256x128xf32>
    %5 = arith.addf %2, %4 : vector<256x128xf32>
    %cst_5 = arith.constant 0.000000e+00 : f32
    %6 = vector.broadcast %cst_5 : f32 to vector<256x128xf32>
    %7 = arith.maximumf %5, %6 : vector<256x128xf32>
    %8 = arith.truncf %7 : vector<256x128xf32> to vector<256x128xbf16>
    %c0_6 = arith.constant 0 : index
    %c0_7 = arith.constant 0 : index
    %9 = vector.load %arg4[%c0_6, %c0_7] : memref<128x8xbf16, #tpu.memory_space<vmem>>, vector<128x8xbf16>
    %cst_8 = arith.constant dense<0.000000e+00> : vector<256x8xf32>
    %10 = tpu.matmul %8, %9, %cst_8 {dimension_numbers = #tpu.dot_dimension_numbers<[1], [0], [0], [1], [0, 0, 1, 1], [], []>} : vector<256x128xbf16>, vector<128x8xbf16>, vector<256x8xf32> -> vector<256x8xf32>
    %c0_9 = arith.constant 0 : index
    %c0_10 = arith.constant 0 : index
    %11 = vector.load %arg5[%c0_9, %c0_10] : memref<1x8xf32, #tpu.memory_space<vmem>>, vector<1x8xf32>
    %12 = vector.broadcast %11 : vector<1x8xf32> to vector<256x8xf32>
    %13 = arith.addf %10, %12 : vector<256x8xf32>
    %c0_11 = arith.constant 0 : index
    %c0_12 = arith.constant 0 : index
    %14 = vector.load %arg6[%c0_11, %c0_12] : memref<256x8xf32, #tpu.memory_space<vmem>>, vector<256x8xf32>
    tpu.vector_store %arg6[%c0_11, %c0_12], %13 {strides = array<i32>} : memref<256x8xf32, #tpu.memory_space<vmem>>, vector<256x8xf32>,
    return
  }
  func.func @transform_0(%arg0: i32) -> (i32, i32) {
    %c0_i32 = arith.constant 0 : i32
    %c0_i32_0 = arith.constant 0 : i32
    return %arg0, %c0_i32 : i32, i32
  }
  func.func @transform_1(%arg0: i32) -> (i32, i32) {
    %c0_i32 = arith.constant 0 : i32
    %c0_i32_0 = arith.constant 0 : i32
    %c0_i32_1 = arith.constant 0 : i32
    return %c0_i32, %c0_i32_0 : i32, i32
  }
  func.func @transform_2(%arg0: i32) -> (i32, i32) {
    %c0_i32 = arith.constant 0 : i32
    %c0_i32_0 = arith.constant 0 : i32
    %c0_i32_1 = arith.constant 0 : i32
    return %c0_i32, %c0_i32_0 : i32, i32
  }
  func.func @transform_3(%arg0: i32) -> (i32, i32) {
    %c0_i32 = arith.constant 0 : i32
    %c0_i32_0 = arith.constant 0 : i32
    %c0_i32_1 = arith.constant 0 : i32
    return %c0_i32, %c0_i32_0 : i32, i32
  }
  func.func @transform_4(%arg0: i32) -> (i32, i32) {
    %c0_i32 = arith.constant 0 : i32
    %c0_i32_0 = arith.constant 0 : i32
    %c0_i32_1 = arith.constant 0 : i32
    return %c0_i32, %c0_i32_0 : i32, i32
  }
  func.func @transform_5(%arg0: i32) -> (i32, i32) {
    %c0_i32 = arith.constant 0 : i32
    %c0_i32_0 = arith.constant 0 : i32
    return %arg0, %c0_i32 : i32, i32
  }
}

</mosaic_0001>

<llo_original>
// kernel: tpu_custom_call.1
$region0: #{tpu_custom_call.1}
  #allocation0 [shape = 'u32[]', space=smem, size = 0x4, offset = 0x4, fixed_abs, tag = 'smem constant byte address 0x4 - core index']
  #allocation1 [shape = 'u32[72,128]{1,0:T(1,128)}', space=vmem, size = 0x9000, scoped, tag = 'internal scratch']
  %s0 = inlined_call_operand.hbm [shape: bf16[512,256], index: 0, kind: input, shape index: {}]
  %s1 = inlined_call_operand.hbm [shape: bf16[256,128], index: 1, kind: input, shape index: {}]
  %s2 = inlined_call_operand.vmem [shape: f32[1,128], index: 2, kind: input, shape index: {}]
  %s3 = inlined_call_operand.vmem [shape: bf16[128,8], index: 3, kind: input, shape index: {}]
  %s4 = inlined_call_operand.vmem [shape: f32[1,8], index: 4, kind: input, shape index: {}]
  %s5 = inlined_call_operand.vmem [shape: f32[512,8], index: 5, kind: output, shape index: {}]
  %s6 = sld [smem:[#allocation0]]
  $region61: #{tpu_custom_call.1} parent=0
    _
  %s8 = ssub.s32 1, %s6
  %s9 = scalar_select 0, %s8, %s6
  $region1: #{tpu_custom_call.1} parent=0
    #allocation2 [shape = 'u8[262144]{0}', space=vmem, size = 0x40000, scoped, tag = 'input window, operand 0']
    #allocation3 [shape = 's32[2]{0}', space=sflag, size = 0x8, scoped, tag = 'scoped memory for tpu_custom_call.1']
    #allocation4 [shape = 'u8[65536]{0}', space=vmem, size = 0x10000, scoped, tag = 'input window, operand 1, single buffered']
    #allocation5 [shape = 's32[1]{0}', space=sflag, size = 0x4, scoped, tag = 'scoped memory for tpu_custom_call.1']
    %10 = vsyncpa [#allocation3], 0
    %s11 = scalar_lea.sflag [#allocation3], 1
    %12 = vsyncpa %s11, 0
    %13 = vsyncpa [#allocation5], 0
    loop: start=0, step=1, limit=4
    $region2: #{tpu_custom_call.1} parent=1 // loop_pre_header
      _
    $region3: #{tpu_custom_call.1} parent=1 // loop_header
      %s15 = sphi 0, %s19
      %p16 = scmp.ge.s32.totalorder %s15, 4
      %s25 = sphi 0, %s27
      %s28 = sphi 0, %s25
      %s29 = sphi 0, %s28
      %s45 = sphi 0, %s29
      %s49 = sphi 0, %s49
      %s51 = sphi 0, %s49
      %s52 = sphi 0, %s51
      %s66 = sphi 0, %s52
      %s70 = sphi 0, %s70
      %s72 = sphi 0, %s70
      %s73 = sphi 0, %s72
      %s87 = sphi 0, %s73
      %s91 = sphi 0, %s91
      %s93 = sphi 0, %s91
      %s94 = sphi 0, %s93
      %s108 = sphi 0, %s94
      %s112 = sphi 0, %s112
      %s114 = sphi 0, %s112
      %s115 = sphi 0, %s114
      %s129 = sphi 0, %s115
      %s135 = sphi 0, %s137
      %s138 = sphi 0, %s135
      %s139 = sphi 0, %s138
      %s155 = sphi 0, %s139
    $region4: #{tpu_custom_call.1} parent=1 // loop_header_branch
      %18 = sbr.rel (%p16) target = $region8
    $region5: #{tpu_custom_call.1} parent=1 // loop_body
      %s20 = ssub.s32 %s15, 1
      %s21 = ssub.s32 %s15, 2
      %s22 = sadd.s32 %s15, 1
      %s23 = ssub.s32 %s15, %s22
      %p24 = scmp.eq.s32.totalorder %s23, 0
      %s26 = sadd.s32 %s25, 1
      %s27 = scalar_select %p24, %s25, %s26
      %p30 = pneg %p24
      %p31 = scmp.eq.s32.totalorder %s15, 1
      %p32 = por %p30, %p31
      %p33 = scmp.ne.s32.totalorder %s25, %s28
      %p34 = scmp.eq.s32.totalorder %s15, 0
      %p35 = por %p33, %p34
      %p36 = scmp.ne.s32.totalorder %s25, %s28
      %p37 = scmp.eq.s32.totalorder %s20, 1
      %p38 = por %p36, %p37
      %p39 = scmp.ne.s32.totalorder %s28, %s29
      %p40 = scmp.eq.s32.totalorder %s20, 0
      %p41 = por %p39, %p40
      %p42 = scmp.ne.s32.totalorder %s28, %s29
      %p43 = scmp.eq.s32.totalorder %s21, 1
      %p44 = por %p42, %p43
      %p46 = scmp.ne.s32.totalorder %s29, %s45
      %p47 = scmp.eq.s32.totalorder %s21, 0
      %p48 = por %p46, %p47
      %s50 = sadd.s32 %s49, 1
      %p53 = scmp.eq.s32.totalorder %s15, 1
      %p54 = scmp.ne.s32.totalorder %s49, %s51
      %p55 = scmp.eq.s32.totalorder %s15, 0
      %p56 = por %p54, %p55
      %p57 = scmp.ne.s32.totalorder %s49, %s51
      %p58 = scmp.eq.s32.totalorder %s20, 1
      %p59 = por %p57, %p58
      %p60 = scmp.ne.s32.totalorder %s51, %s52
      %p61 = scmp.eq.s32.totalorder %s20, 0
      %p62 = por %p60, %p61
      %p63 = scmp.ne.s32.totalorder %s51, %s52
      %p64 = scmp.eq.s32.totalorder %s21, 1
      %p65 = por %p63, %p64
      %p67 = scmp.ne.s32.totalorder %s52, %s66
      %p68 = scmp.eq.s32.totalorder %s21, 0
      %p69 = por %p67, %p68
      %s71 = sadd.s32 %s70, 1
      %p74 = scmp.eq.s32.totalorder %s15, 1
      %p75 = scmp.ne.s32.totalorder %s70, %s72
      %p76 = scmp.eq.s32.totalorder %s15, 0
      %p77 = por %p75, %p76
      %p78 = scmp.ne.s32.totalorder %s70, %s72
      %p79 = scmp.eq.s32.totalorder %s20, 1
      %p80 = por %p78, %p79
      %p81 = scmp.ne.s32.totalorder %s72, %s73
      %p82 = scmp.eq.s32.totalorder %s20, 0
      %p83 = por %p81, %p82
      %p84 = scmp.ne.s32.totalorder %s72, %s73
      %p85 = scmp.eq.s32.totalorder %s21, 1
      %p86 = por %p84, %p85
      %p88 = scmp.ne.s32.totalorder %s73, %s87
      %p89 = scmp.eq.s32.totalorder %s21, 0
      %p90 = por %p88, %p89
      %s92 = sadd.s32 %s91, 1
      %p95 = scmp.eq.s32.totalorder %s15, 1
      %p96 = scmp.ne.s32.totalorder %s91, %s93
      %p97 = scmp.eq.s32.totalorder %s15, 0
      %p98 = por %p96, %p97
      %p99 = scmp.ne.s32.totalorder %s91, %s93
      %p100 = scmp.eq.s32.totalorder %s20, 1
      %p101 = por %p99, %p100
      %p102 = scmp.ne.s32.totalorder %s93, %s94
      %p103 = scmp.eq.s32.totalorder %s20, 0
      %p104 = por %p102, %p103
      %p105 = scmp.ne.s32.totalorder %s93, %s94
      %p106 = scmp.eq.s32.totalorder %s21, 1
      %p107 = por %p105, %p106
      %p109 = scmp.ne.s32.totalorder %s94, %s108
      %p110 = scmp.eq.s32.totalorder %s21, 0
      %p111 = por %p109, %p110
      %s113 = sadd.s32 %s112, 1
      %p116 = scmp.eq.s32.totalorder %s15, 1
      %p117 = scmp.ne.s32.totalorder %s112, %s114
      %p118 = scmp.eq.s32.totalorder %s15, 0
      %p119 = por %p117, %p118
      %p120 = scmp.ne.s32.totalorder %s112, %s114
      %p121 = scmp.eq.s32.totalorder %s20, 1
      %p122 = por %p120, %p121
      %p123 = scmp.ne.s32.totalorder %s114, %s115
      %p124 = scmp.eq.s32.totalorder %s20, 0
      %p125 = por %p123, %p124
      %p126 = scmp.ne.s32.totalorder %s114, %s115
      %p127 = scmp.eq.s32.totalorder %s21, 1
      %p128 = por %p126, %p127
      %p130 = scmp.ne.s32.totalorder %s115, %s129
      %p131 = scmp.eq.s32.totalorder %s21, 0
      %p132 = por %p130, %p131
      %s133 = ssub.s32 %s15, %s22
      %p134 = scmp.eq.s32.totalorder %s133, 0
      %s136 = sadd.s32 %s135, 1
      %s137 = scalar_select %p134, %s135, %s136
      %p140 = pneg %p134
      %p141 = scmp.eq.s32.totalorder %s15, 1
      %p142 = por %p140, %p141
      %p143 = scmp.ne.s32.totalorder %s135, %s138
      %p144 = scmp.eq.s32.totalorder %s15, 0
      %p145 = por %p143, %p144
      %p146 = scmp.ne.s32.totalorder %s135, %s138
      %p147 = scmp.eq.s32.totalorder %s20, 1
      %p148 = por %p146, %p147
      %p149 = scmp.ne.s32.totalorder %s138, %s139
      %p150 = scmp.eq.s32.totalorder %s20, 0
      %p151 = por %p149, %p150
      %p152 = scmp.ne.s32.totalorder %s138, %s139
      %p153 = scmp.eq.s32.totalorder %s21, 1
      %p154 = por %p152, %p153
      %p156 = scmp.ne.s32.totalorder %s139, %s155
      %p157 = scmp.eq.s32.totalorder %s21, 0
      %p158 = por %p156, %p157
      %p159 = scmp.le.s32.totalorder 1, %s15
      %p160 = scmp.lt.s32.totalorder %s15, 3
      %p161 = pnand %p159, %p160
      %p162 = pneg %p161
      // Predicated region
      $region9: #{tpu_custom_call.1} parent=5 // pred_check
        _
      $region10: #{tpu_custom_call.1} parent=5 // pred_check_branch
        %164 = sbr.rel (%p161) target = $region12
      $region11: #{tpu_custom_call.1} parent=5 // pred_region
        %s165 = ssub.s32 %s15, 1
        // Predicated region
        $region13: #{tpu_custom_call.1} parent=11 // pred_check
          %p166 = pneg %p62
        $region14: #{tpu_custom_call.1} parent=11 // pred_check_branch
          %168 = sbr.rel (%p166) target = $region16
        $region15: #{tpu_custom_call.1} parent=11 // pred_region
          %170 = vsyncadd [#allocation5], 0
          %s171 = sshll.u32 %s1, 4
          %s172 = int_to_ptr.hbm [resolvable:$true] %s171
          %s173 = sshll.u32 [#allocation4], 4
          %s174 = int_to_ptr.vmem [resolvable:$true] %s173
          %179 = dma.hbm_to_vmem [thread:$0]  %s172, 2048, %s174, [#allocation5], 64, 64, 4
        $region16: #{tpu_custom_call.1} parent=11 // pred_fallthru
          _
        // Predicated region
        $region17: #{tpu_custom_call.1} parent=11 // pred_check
          %p180 = pneg %p83
        $region18: #{tpu_custom_call.1} parent=11 // pred_check_branch
          %182 = sbr.rel (%p180) target = $region20
        $region19: #{tpu_custom_call.1} parent=11 // pred_region
          _
        $region20: #{tpu_custom_call.1} parent=11 // pred_fallthru
          _
        // Predicated region
        $region21: #{tpu_custom_call.1} parent=11 // pred_check
          %p183 = pneg %p104
        $region22: #{tpu_custom_call.1} parent=11 // pred_check_branch
          %185 = sbr.rel (%p183) target = $region24
        $region23: #{tpu_custom_call.1} parent=11 // pred_region
          _
        $region24: #{tpu_custom_call.1} parent=11 // pred_fallthru
          _
        // Predicated region
        $region25: #{tpu_custom_call.1} parent=11 // pred_check
          %p186 = pneg %p125
        $region26: #{tpu_custom_call.1} parent=11 // pred_check_branch
          %188 = sbr.rel (%p186) target = $region28
        $region27: #{tpu_custom_call.1} parent=11 // pred_region
          _
        $region28: #{tpu_custom_call.1} parent=11 // pred_fallthru
          _
      $region12: #{tpu_custom_call.1} parent=5 // pred_fallthru
        _
      %p189 = scmp.lt.s32.totalorder %s15, 2
      // Predicated region
      $region29: #{tpu_custom_call.1} parent=5 // pred_check
        %p190 = pneg %p189
      $region30: #{tpu_custom_call.1} parent=5 // pred_check_branch
        %192 = sbr.rel (%p190) target = $region32
      $region31: #{tpu_custom_call.1} parent=5 // pred_region
        // Predicated region
        $region33: #{tpu_custom_call.1} parent=31 // pred_check
          %p193 = pneg %p35
        $region34: #{tpu_custom_call.1} parent=31 // pred_check_branch
          %195 = sbr.rel (%p193) target = $region36
        $region35: #{tpu_custom_call.1} parent=31 // pred_region
          %s196 = sand.u32 %s25, 1
          %s197 = scalar_lea.sflag [#allocation3], %s196
          %s198 = sand.u32 %s25, 1
          %s199 = smul.addr %s198, 256
          %s200 = scalar_lea.vmem [#allocation2], %s199
          %s201 = smul.u32 32, %s15
          %203 = vsyncadd %s197, 0
          %s204 = smul.addr %s201, 2
          %s205 = smul.addr %s204, 4
          %s206 = scalar_lea.hbm %s0, %s205
          %s207 = sshll.u32 %s206, 4
          %s208 = int_to_ptr.hbm [resolvable:$true] %s207
          %s209 = sshll.u32 %s200, 4
          %s210 = int_to_ptr.vmem [resolvable:$true] %s209
          %215 = dma.hbm_to_vmem [thread:$0]  %s208, 4096, %s210, %s197, 128, 128, 8
        $region36: #{tpu_custom_call.1} parent=31 // pred_fallthru
          _
      $region32: #{tpu_custom_call.1} parent=5 // pred_fallthru
        _
      %p216 = scmp.le.s32.totalorder 1, %s15
      %p217 = scmp.lt.s32.totalorder %s15, 3
      %p218 = pnand %p216, %p217
      %p219 = pneg %p218
      // Predicated region
      $region37: #{tpu_custom_call.1} parent=5 // pred_check
        _
      $region38: #{tpu_custom_call.1} parent=5 // pred_check_branch
        %221 = sbr.rel (%p218) target = $region40
      $region39: #{tpu_custom_call.1} parent=5 // pred_region
        %s222 = ssub.s32 %s15, 1
        %s223 = sand.u32 %s28, 1
        %s224 = scalar_lea.sflag [#allocation3], %s223
        %s225 = sand.u32 %s28, 1
        %s226 = smul.addr %s225, 256
        %s227 = scalar_lea.vmem [#allocation2], %s226
        // Predicated region
        $region41: #{tpu_custom_call.1} parent=39 // pred_check
          %p228 = pneg %p41
        $region42: #{tpu_custom_call.1} parent=39 // pred_check_branch
          %230 = sbr.rel (%p228) target = $region44
        $region43: #{tpu_custom_call.1} parent=39 // pred_region
          %232 = dma.done %s224, 4096
        $region44: #{tpu_custom_call.1} parent=39 // pred_fallthru
          _
        // Predicated region
        $region45: #{tpu_custom_call.1} parent=39 // pred_check
          %p233 = pneg %p62
        $region46: #{tpu_custom_call.1} parent=39 // pred_check_branch
          %235 = sbr.rel (%p233) target = $region48
        $region47: #{tpu_custom_call.1} parent=39 // pred_region
          %237 = dma.done [#allocation5], 2048
        $region48: #{tpu_custom_call.1} parent=39 // pred_fallthru
          _
        %s238 = sand.u32 %s28, 1
        %s239 = scalar_lea.sflag [#allocation3], %s238
        %s240 = sand.u32 %s28, 1
        %s241 = smul.addr %s240, 256
        %s242 = scalar_lea.vmem [#allocation2], %s241
        %p243 = pneg %p41
        %p244 = pneg %p38
        %p245 = pneg %p62
        %p246 = pneg %p59
        %p247 = pneg %p83
        %p248 = pneg %p80
        %p249 = pneg %p104
        %p250 = pneg %p101
        %p251 = pneg %p125
        %p252 = pneg %p122
        %p253 = pneg %p151
        %p254 = pneg %p148
        %s255 = smul.u32 32, %s20
        %p256 = scmp.lt.s32.totalorder %s255, 63
        %s257 = scalar_select %p256, %s255, 63
        %s258 = smul.addr %s257, 8
        %s259 = scalar_lea.vmem %s5, %s258
        %s260 = smul.u32 32, %s20
        %s261 = smul.u32 32, %s20
        %p262 = scmp.lt.s32.totalorder %s261, 63
        %s263 = scalar_select %p262, %s261, 63
        %s264 = smul.addr %s263, 8
        %s265 = scalar_lea.vmem %s5, %s264
        %s266 = smul.u32 32, %s20
        %v267 = vld [vmem:[%s227] sm:$0xff]
        %v268 = vld [vmem:[%s227 + $0x8] sm:$0xff]
        %v269 = vld [vmem:[%s227 + $0x10] sm:$0xff]
        %v270 = vld [vmem:[%s227 + $0x18] sm:$0xff]
        %v271 = vld [vmem:[%s227 + $0x20] sm:$0xff]
        %v272 = vld [vmem:[%s227 + $0x28] sm:$0xff]
        %v273 = vld [vmem:[%s227 + $0x30] sm:$0xff]
        %v274 = vld [vmem:[%s227 + $0x38] sm:$0xff]
        %v275 = vld [vmem:[%s227 + $0x40] sm:$0xff]
        %v276 = vld [vmem:[%s227 + $0x48] sm:$0xff]
        %v277 = vld [vmem:[%s227 + $0x50] sm:$0xff]
        %v278 = vld [vmem:[%s227 + $0x58] sm:$0xff]
        %v279 = vld [vmem:[%s227 + $0x60] sm:$0xff]
        %v280 = vld [vmem:[%s227 + $0x68] sm:$0xff]
        %v281 = vld [vmem:[%s227 + $0x70] sm:$0xff]
        %v282 = vld [vmem:[%s227 + $0x78] sm:$0xff]
        %v283 = vld [vmem:[%s227 + $0x80] sm:$0xff]
        %v284 = vld [vmem:[%s227 + $0x88] sm:$0xff]
        %v285 = vld [vmem:[%s227 + $0x90] sm:$0xff]
        %v286 = vld [vmem:[%s227 + $0x98] sm:$0xff]
        %v287 = vld [vmem:[%s227 + $0xa0] sm:$0xff]
        %v288 = vld [vmem:[%s227 + $0xa8] sm:$0xff]
        %v289 = vld [vmem:[%s227 + $0xb0] sm:$0xff]
        %v290 = vld [vmem:[%s227 + $0xb8] sm:$0xff]
        %v291 = vld [vmem:[%s227 + $0xc0] sm:$0xff]
        %v292 = vld [vmem:[%s227 + $0xc8] sm:$0xff]
        %v293 = vld [vmem:[%s227 + $0xd0] sm:$0xff]
        %v294 = vld [vmem:[%s227 + $0xd8] sm:$0xff]
        %v295 = vld [vmem:[%s227 + $0xe0] sm:$0xff]
        %v296 = vld [vmem:[%s227 + $0xe8] sm:$0xff]
        %v297 = vld [vmem:[%s227 + $0xf0] sm:$0xff]
        %v298 = vld [vmem:[%s227 + $0xf8] sm:$0xff]
        %v299 = vld [vmem:[#allocation4] sm:$0xf]
        %v300 = vld [vmem:[#allocation4 + $0x4] sm:$0xf]
        %v301 = vld [vmem:[#allocation4 + $0x8] sm:$0xf]
        %v302 = vld [vmem:[#allocation4 + $0xc] sm:$0xf]
        %v303 = vld [vmem:[#allocation4 + $0x10] sm:$0xf]
        %v304 = vld [vmem:[#allocation4 + $0x14] sm:$0xf]
        %v305 = vld [vmem:[#allocation4 + $0x18] sm:$0xf]
        %v306 = vld [vmem:[#allocation4 + $0x1c] sm:$0xf]
        %v307 = vld [vmem:[#allocation4 + $0x20] sm:$0xf]
        %v308 = vld [vmem:[#allocation4 + $0x24] sm:$0xf]
        %v309 = vld [vmem:[#allocation4 + $0x28] sm:$0xf]
        %v310 = vld [vmem:[#allocation4 + $0x2c] sm:$0xf]
        %v311 = vld [vmem:[#allocation4 + $0x30] sm:$0xf]
        %v312 = vld [vmem:[#allocation4 + $0x34] sm:$0xf]
        %v313 = vld [vmem:[#allocation4 + $0x38] sm:$0xf]
        %v314 = vld [vmem:[#allocation4 + $0x3c] sm:$0xf]
        %v315 = vld [vmem:[#allocation4 + $0x40] sm:$0xf]
        %v316 = vld [vmem:[#allocation4 + $0x44] sm:$0xf]
        %v317 = vld [vmem:[#allocation4 + $0x48] sm:$0xf]
        %v318 = vld [vmem:[#allocation4 + $0x4c] sm:$0xf]
        %v319 = vld [vmem:[#allocation4 + $0x50] sm:$0xf]
        %v320 = vld [vmem:[#allocation4 + $0x54] sm:$0xf]
        %v321 = vld [vmem:[#allocation4 + $0x58] sm:$0xf]
        %v322 = vld [vmem:[#allocation4 + $0x5c] sm:$0xf]
        %v323 = vld [vmem:[#allocation4 + $0x60] sm:$0xf]
        %v324 = vld [vmem:[#allocation4 + $0x64] sm:$0xf]
        %v325 = vld [vmem:[#allocation4 + $0x68] sm:$0xf]
        %v326 = vld [vmem:[#allocation4 + $0x6c] sm:$0xf]
        %v327 = vld [vmem:[#allocation4 + $0x70] sm:$0xf]
        %v328 = vld [vmem:[#allocation4 + $0x74] sm:$0xf]
        %v329 = vld [vmem:[#allocation4 + $0x78] sm:$0xf]
        %v330 = vld [vmem:[#allocation4 + $0x7c] sm:$0xf]
        %v331 = vld [vmem:[%s2] sm:$0x1]
        %v333 = vperm.slane %v331, 0
        %v367 = vunpack.c.l.b16 %v267
        %v368 = vunpack.c.h.b16 %v267
        %v369 = vunpack.c.l.b16 %v268
        %v370 = vunpack.c.h.b16 %v268
        %v371 = vunpack.c.l.b16 %v269
        %v372 = vunpack.c.h.b16 %v269
        %v373 = vunpack.c.l.b16 %v270
        %v374 = vunpack.c.h.b16 %v270
        %v375 = vunpack.c.l.b16 %v271
        %v376 = vunpack.c.h.b16 %v271
        %v377 = vunpack.c.l.b16 %v272
        %v378 = vunpack.c.h.b16 %v272
        %v379 = vunpack.c.l.b16 %v273
        %v380 = vunpack.c.h.b16 %v273
        %v381 = vunpack.c.l.b16 %v274
        %v382 = vunpack.c.h.b16 %v274
        %v383 = vunpack.c.l.b16 %v275
        %v384 = vunpack.c.h.b16 %v275
        %v385 = vunpack.c.l.b16 %v276
        %v386 = vunpack.c.h.b16 %v276
        %v387 = vunpack.c.l.b16 %v277
        %v388 = vunpack.c.h.b16 %v277
        %v389 = vunpack.c.l.b16 %v278
        %v390 = vunpack.c.h.b16 %v278
        %v391 = vunpack.c.l.b16 %v279
        %v392 = vunpack.c.h.b16 %v279
        %v393 = vunpack.c.l.b16 %v280
        %v394 = vunpack.c.h.b16 %v280
        %v395 = vunpack.c.l.b16 %v281
        %v396 = vunpack.c.h.b16 %v281
        %v397 = vunpack.c.l.b16 %v282
        %v398 = vunpack.c.h.b16 %v282
        %v399 = vunpack.c.l.b16 %v283
        %v400 = vunpack.c.h.b16 %v283
        %v401 = vunpack.c.l.b16 %v284
        %v402 = vunpack.c.h.b16 %v284
        %v403 = vunpack.c.l.b16 %v285
        %v404 = vunpack.c.h.b16 %v285
        %v405 = vunpack.c.l.b16 %v286
        %v406 = vunpack.c.h.b16 %v286
        %v407 = vunpack.c.l.b16 %v287
        %v408 = vunpack.c.h.b16 %v287
        %v409 = vunpack.c.l.b16 %v288
        %v410 = vunpack.c.h.b16 %v288
        %v411 = vunpack.c.l.b16 %v289
        %v412 = vunpack.c.h.b16 %v289
        %v413 = vunpack.c.l.b16 %v290
        %v414 = vunpack.c.h.b16 %v290
        %v415 = vunpack.c.l.b16 %v291
        %v416 = vunpack.c.h.b16 %v291
        %v417 = vunpack.c.l.b16 %v292
        %v418 = vunpack.c.h.b16 %v292
        %v419 = vunpack.c.l.b16 %v293
        %v420 = vunpack.c.h.b16 %v293
        %v421 = vunpack.c.l.b16 %v294
        %v422 = vunpack.c.h.b16 %v294
        %v423 = vunpack.c.l.b16 %v295
        %v424 = vunpack.c.h.b16 %v295
        %v425 = vunpack.c.l.b16 %v296
        %v426 = vunpack.c.h.b16 %v296
        %v427 = vunpack.c.l.b16 %v297
        %v428 = vunpack.c.h.b16 %v297
        %v429 = vunpack.c.l.b16 %v298
        %v430 = vunpack.c.h.b16 %v298
        %v431 = vpack.c.b16 %v369, %v367
        %v432 = vpack.c.b16 %v370, %v368
        %v433 = vpack.c.b16 %v373, %v371
        %v434 = vpack.c.b16 %v374, %v372
        %v435 = vpack.c.b16 %v377, %v375
        %v436 = vpack.c.b16 %v378, %v376
        %v437 = vpack.c.b16 %v381, %v379
        %v438 = vpack.c.b16 %v382, %v380
        %v439 = vpack.c.b16 %v385, %v383
        %v440 = vpack.c.b16 %v386, %v384
        %v441 = vpack.c.b16 %v389, %v387
        %v442 = vpack.c.b16 %v390, %v388
        %v443 = vpack.c.b16 %v393, %v391
        %v444 = vpack.c.b16 %v394, %v392
        %v445 = vpack.c.b16 %v397, %v395
        %v446 = vpack.c.b16 %v398, %v396
        %v447 = vpack.c.b16 %v401, %v399
        %v448 = vpack.c.b16 %v402, %v400
        %v449 = vpack.c.b16 %v405, %v403
        %v450 = vpack.c.b16 %v406, %v404
        %v451 = vpack.c.b16 %v409, %v407
        %v452 = vpack.c.b16 %v410, %v408
        %v453 = vpack.c.b16 %v413, %v411
        %v454 = vpack.c.b16 %v414, %v412
        %v455 = vpack.c.b16 %v417, %v415
        %v456 = vpack.c.b16 %v418, %v416
        %v457 = vpack.c.b16 %v421, %v419
        %v458 = vpack.c.b16 %v422, %v420
        %v459 = vpack.c.b16 %v425, %v423
        %v460 = vpack.c.b16 %v426, %v424
        %v461 = vpack.c.b16 %v429, %v427
        %v462 = vpack.c.b16 %v430, %v428
        %v527 = vunpack.c.l.b16 %v299
        %v528 = vunpack.c.l.b16 %v300
        %v529 = vunpack.c.l.b16 %v301
        %v530 = vunpack.c.l.b16 %v302
        %v531 = vunpack.c.l.b16 %v303
        %v532 = vunpack.c.l.b16 %v304
        %v533 = vunpack.c.l.b16 %v305
        %v534 = vunpack.c.l.b16 %v306
        %v535 = vunpack.c.l.b16 %v307
        %v536 = vunpack.c.l.b16 %v308
        %v537 = vunpack.c.l.b16 %v309
        %v538 = vunpack.c.l.b16 %v310
        %v539 = vunpack.c.l.b16 %v311
        %v540 = vunpack.c.l.b16 %v312
        %v541 = vunpack.c.l.b16 %v313
        %v542 = vunpack.c.l.b16 %v314
        %v543 = vunpack.c.l.b16 %v315
        %v544 = vunpack.c.l.b16 %v316
        %v545 = vunpack.c.l.b16 %v317
        %v546 = vunpack.c.l.b16 %v318
        %v547 = vunpack.c.l.b16 %v319
        %v548 = vunpack.c.l.b16 %v320
        %v549 = vunpack.c.l.b16 %v321
        %v550 = vunpack.c.l.b16 %v322
        %v551 = vunpack.c.l.b16 %v323
        %v552 = vunpack.c.l.b16 %v324
        %v553 = vunpack.c.l.b16 %v325
        %v554 = vunpack.c.l.b16 %v326
        %v555 = vunpack.c.l.b16 %v327
        %v556 = vunpack.c.l.b16 %v328
        %v557 = vunpack.c.l.b16 %v329
        %v558 = vunpack.c.l.b16 %v330
        %v559 = vpack.c.b16 %v528, %v527
        %v560 = vpack.c.b16 %v530, %v529
        %v561 = vpack.c.b16 %v532, %v531
        %v562 = vpack.c.b16 %v534, %v533
        %v563 = vpack.c.b16 %v536, %v535
        %v564 = vpack.c.b16 %v538, %v537
        %v565 = vpack.c.b16 %v540, %v539
        %v566 = vpack.c.b16 %v542, %v541
        %v567 = vpack.c.b16 %v544, %v543
        %v568 = vpack.c.b16 %v546, %v545
        %v569 = vpack.c.b16 %v548, %v547
        %v570 = vpack.c.b16 %v550, %v549
        %v571 = vpack.c.b16 %v552, %v551
        %v572 = vpack.c.b16 %v554, %v553
        %v573 = vpack.c.b16 %v556, %v555
        %v574 = vpack.c.b16 %v558, %v557
        %591 = vmatpush.bf16.msra.mxu0 %v566
        %592 = vmatpush.bf16.msra.mxu0 %v565
        %593 = vmatpush.bf16.msra.mxu0 %v564
        %594 = vmatpush.bf16.msra.mxu0 %v563
        %595 = vmatpush.bf16.msra.mxu0 %v562
        %596 = vmatpush.bf16.msra.mxu0 %v561
        %597 = vmatpush.bf16.msra.mxu0 %v560
        %598 = vmatpush.bf16.msra.mxu0 %v559
        %599 = vmatmul.bf16.gmra.mxu0 %v431
        %v600 = vpop.f32.mrf.mxu0
        %v601 = vadd.f32 %v333, %v600
        %v602 = vpop.f32.mrf.mxu0
        %v603 = vadd.f32 %v333, %v602
        %604 = vmatmul.bf16.gmra.mxu0 %v433
        %v605 = vpop.f32.mrf.mxu0
        %v606 = vadd.f32 %v333, %v605
        %v607 = vpop.f32.mrf.mxu0
        %v608 = vadd.f32 %v333, %v607
        %609 = vmatmul.bf16.gmra.mxu0 %v435
        %v610 = vpop.f32.mrf.mxu0
        %v611 = vadd.f32 %v333, %v610
        %v612 = vpop.f32.mrf.mxu0
        %v613 = vadd.f32 %v333, %v612
        %614 = vmatmul.bf16.gmra.mxu0 %v437
        %v615 = vpop.f32.mrf.mxu0
        %v616 = vadd.f32 %v333, %v615
        %v617 = vpop.f32.mrf.mxu0
        %v618 = vadd.f32 %v333, %v617
        %619 = vmatmul.bf16.gmra.mxu0 %v439
        %v620 = vpop.f32.mrf.mxu0
        %v621 = vadd.f32 %v333, %v620
        %v622 = vpop.f32.mrf.mxu0
        %v623 = vadd.f32 %v333, %v622
        %624 = vmatmul.bf16.gmra.mxu0 %v441
        %v625 = vpop.f32.mrf.mxu0
        %v626 = vadd.f32 %v333, %v625
        %v627 = vpop.f32.mrf.mxu0
        %v628 = vadd.f32 %v333, %v627
        %629 = vmatmul.bf16.gmra.mxu0 %v443
        %v630 = vpop.f32.mrf.mxu0
        %v631 = vadd.f32 %v333, %v630
        %v632 = vpop.f32.mrf.mxu0
        %v633 = vadd.f32 %v333, %v632
        %634 = vmatmul.bf16.gmra.mxu0 %v445
        %v635 = vpop.f32.mrf.mxu0
        %v636 = vadd.f32 %v333, %v635
        %v637 = vpop.f32.mrf.mxu0
        %v638 = vadd.f32 %v333, %v637
        %639 = vmatmul.bf16.gmra.mxu0 %v447
        %v640 = vpop.f32.mrf.mxu0
        %v641 = vadd.f32 %v333, %v640
        %v642 = vpop.f32.mrf.mxu0
        %v643 = vadd.f32 %v333, %v642
        %644 = vmatmul.bf16.gmra.mxu0 %v449
        %v645 = vpop.f32.mrf.mxu0
        %v646 = vadd.f32 %v333, %v645
        %v647 = vpop.f32.mrf.mxu0
        %v648 = vadd.f32 %v333, %v647
        %649 = vmatmul.bf16.gmra.mxu0 %v451
        %v650 = vpop.f32.mrf.mxu0
        %v651 = vadd.f32 %v333, %v650
        %v652 = vpop.f32.mrf.mxu0
        %v653 = vadd.f32 %v333, %v652
        %654 = vmatmul.bf16.gmra.mxu0 %v453
        %v655 = vpop.f32.mrf.mxu0
        %v656 = vadd.f32 %v333, %v655
        %v657 = vpop.f32.mrf.mxu0
        %v658 = vadd.f32 %v333, %v657
        %659 = vmatmul.bf16.gmra.mxu0 %v455
        %v660 = vpop.f32.mrf.mxu0
        %v661 = vadd.f32 %v333, %v660
        %v662 = vpop.f32.mrf.mxu0
        %v663 = vadd.f32 %v333, %v662
        %664 = vmatmul.bf16.gmra.mxu0 %v457
        %v665 = vpop.f32.mrf.mxu0
        %v666 = vadd.f32 %v333, %v665
        %v667 = vpop.f32.mrf.mxu0
        %v668 = vadd.f32 %v333, %v667
        %669 = vmatmul.bf16.gmra.mxu0 %v459
        %v670 = vpop.f32.mrf.mxu0
        %v671 = vadd.f32 %v333, %v670
        %v672 = vpop.f32.mrf.mxu0
        %v673 = vadd.f32 %v333, %v672
        %674 = vmatmul.bf16.gmra.mxu0 %v461
        %v675 = vpop.f32.mrf.mxu0
        %v676 = vadd.f32 %v333, %v675
        %v677 = vpop.f32.mrf.mxu0
        %v678 = vadd.f32 %v333, %v677
        %679 = vdwg.mxu0
        %680 = vmatpush.bf16.msra.mxu0 %v574
        %681 = vmatpush.bf16.msra.mxu0 %v573
        %682 = vmatpush.bf16.msra.mxu0 %v572
        %683 = vmatpush.bf16.msra.mxu0 %v571
        %684 = vmatpush.bf16.msra.mxu0 %v570
        %685 = vmatpush.bf16.msra.mxu0 %v569
        %686 = vmatpush.bf16.msra.mxu0 %v568
        %687 = vmatpush.bf16.msra.mxu0 %v567
        %688 = vmatmul.bf16.gmra.mxu0 %v432
        %v689 = vpop.f32.mrf.mxu0
        %v690 = vadd.f32 %v601, %v689
        %v691 = vpop.f32.mrf.mxu0
        %v692 = vadd.f32 %v603, %v691
        %693 = vmatmul.bf16.gmra.mxu0 %v434
        %v694 = vpop.f32.mrf.mxu0
        %v695 = vadd.f32 %v606, %v694
        %v696 = vpop.f32.mrf.mxu0
        %v697 = vadd.f32 %v608, %v696
        %698 = vmatmul.bf16.gmra.mxu0 %v436
        %v699 = vpop.f32.mrf.mxu0
        %v700 = vadd.f32 %v611, %v699
        %v701 = vpop.f32.mrf.mxu0
        %v702 = vadd.f32 %v613, %v701
        %703 = vmatmul.bf16.gmra.mxu0 %v438
        %v704 = vpop.f32.mrf.mxu0
        %v705 = vadd.f32 %v616, %v704
        %v706 = vpop.f32.mrf.mxu0
        %v707 = vadd.f32 %v618, %v706
        %708 = vmatmul.bf16.gmra.mxu0 %v440
        %v709 = vpop.f32.mrf.mxu0
        %v710 = vadd.f32 %v621, %v709
        %v711 = vpop.f32.mrf.mxu0
        %v712 = vadd.f32 %v623, %v711
        %713 = vmatmul.bf16.gmra.mxu0 %v442
        %v714 = vpop.f32.mrf.mxu0
        %v715 = vadd.f32 %v626, %v714
        %v716 = vpop.f32.mrf.mxu0
        %v717 = vadd.f32 %v628, %v716
        %718 = vmatmul.bf16.gmra.mxu0 %v444
        %v719 = vpop.f32.mrf.mxu0
        %v720 = vadd.f32 %v631, %v719
        %v721 = vpop.f32.mrf.mxu0
        %v722 = vadd.f32 %v633, %v721
        %723 = vmatmul.bf16.gmra.mxu0 %v446
        %v724 = vpop.f32.mrf.mxu0
        %v725 = vadd.f32 %v636, %v724
        %v726 = vpop.f32.mrf.mxu0
        %v727 = vadd.f32 %v638, %v726
        %728 = vmatmul.bf16.gmra.mxu0 %v448
        %v729 = vpop.f32.mrf.mxu0
        %v730 = vadd.f32 %v641, %v729
        %v731 = vpop.f32.mrf.mxu0
        %v732 = vadd.f32 %v643, %v731
        %733 = vmatmul.bf16.gmra.mxu0 %v450
        %v734 = vpop.f32.mrf.mxu0
        %v735 = vadd.f32 %v646, %v734
        %v736 = vpop.f32.mrf.mxu0
        %v737 = vadd.f32 %v648, %v736
        %738 = vmatmul.bf16.gmra.mxu0 %v452
        %v739 = vpop.f32.mrf.mxu0
        %v740 = vadd.f32 %v651, %v739
        %v741 = vpop.f32.mrf.mxu0
        %v742 = vadd.f32 %v653, %v741
        %743 = vmatmul.bf16.gmra.mxu0 %v454
        %v744 = vpop.f32.mrf.mxu0
        %v745 = vadd.f32 %v656, %v744
        %v746 = vpop.f32.mrf.mxu0
        %v747 = vadd.f32 %v658, %v746
        %748 = vmatmul.bf16.gmra.mxu0 %v456
        %v749 = vpop.f32.mrf.mxu0
        %v750 = vadd.f32 %v661, %v749
        %v751 = vpop.f32.mrf.mxu0
        %v752 = vadd.f32 %v663, %v751
        %753 = vmatmul.bf16.gmra.mxu0 %v458
        %v754 = vpop.f32.mrf.mxu0
        %v755 = vadd.f32 %v666, %v754
        %v756 = vpop.f32.mrf.mxu0
        %v757 = vadd.f32 %v668, %v756
        %758 = vmatmul.bf16.gmra.mxu0 %v460
        %v759 = vpop.f32.mrf.mxu0
        %v760 = vadd.f32 %v671, %v759
        %v761 = vpop.f32.mrf.mxu0
        %v762 = vadd.f32 %v673, %v761
        %763 = vmatmul.bf16.gmra.mxu0 %v462
        %v764 = vpop.f32.mrf.mxu0
        %v765 = vadd.f32 %v676, %v764
        %v766 = vpop.f32.mrf.mxu0
        %v767 = vadd.f32 %v678, %v766
        %768 = vdwg.mxu0
        %v769 = vmax.f32 %v690, 0.0
        %v770 = vmax.f32 %v692, 0.0
        %v771 = vmax.f32 %v695, 0.0
        %v772 = vmax.f32 %v697, 0.0
        %v773 = vmax.f32 %v700, 0.0
        %v774 = vmax.f32 %v702, 0.0
        %v775 = vmax.f32 %v705, 0.0
        %v776 = vmax.f32 %v707, 0.0
        %v777 = vmax.f32 %v710, 0.0
        %v778 = vmax.f32 %v712, 0.0
        %v779 = vmax.f32 %v715, 0.0
        %v780 = vmax.f32 %v717, 0.0
        %v781 = vmax.f32 %v720, 0.0
        %v782 = vmax.f32 %v722, 0.0
        %v783 = vmax.f32 %v725, 0.0
        %v784 = vmax.f32 %v727, 0.0
        %v785 = vmax.f32 %v730, 0.0
        %v786 = vmax.f32 %v732, 0.0
        %v787 = vmax.f32 %v735, 0.0
        %v788 = vmax.f32 %v737, 0.0
        %v789 = vmax.f32 %v740, 0.0
        %v790 = vmax.f32 %v742, 0.0
        %v791 = vmax.f32 %v745, 0.0
        %v792 = vmax.f32 %v747, 0.0
        %v793 = vmax.f32 %v750, 0.0
        %v794 = vmax.f32 %v752, 0.0
        %v795 = vmax.f32 %v755, 0.0
        %v796 = vmax.f32 %v757, 0.0
        %v797 = vmax.f32 %v760, 0.0
        %v798 = vmax.f32 %v762, 0.0
        %v799 = vmax.f32 %v765, 0.0
        %v800 = vmax.f32 %v767, 0.0
        %v801 = vpack.c.bf16 %v770, %v769
        %v802 = vpack.c.bf16 %v772, %v771
        %v803 = vpack.c.bf16 %v774, %v773
        %v804 = vpack.c.bf16 %v776, %v775
        %v805 = vpack.c.bf16 %v778, %v777
        %v806 = vpack.c.bf16 %v780, %v779
        %v807 = vpack.c.bf16 %v782, %v781
        %v808 = vpack.c.bf16 %v784, %v783
        %v809 = vpack.c.bf16 %v786, %v785
        %v810 = vpack.c.bf16 %v788, %v787
        %v811 = vpack.c.bf16 %v790, %v789
        %v812 = vpack.c.bf16 %v792, %v791
        %v813 = vpack.c.bf16 %v794, %v793
        %v814 = vpack.c.bf16 %v796, %v795
        %v815 = vpack.c.bf16 %v798, %v797
        %v816 = vpack.c.bf16 %v800, %v799
        %v817 = vld [vmem:[%s3] sm:$0xf]
        %v818 = vld [vmem:[%s3 + $0x4] sm:$0xf]
        %v819 = vld [vmem:[%s3 + $0x8] sm:$0xf]
        %v820 = vld [vmem:[%s3 + $0xc] sm:$0xf]
        %v821 = vld [vmem:[%s3 + $0x10] sm:$0xf]
        %v822 = vld [vmem:[%s3 + $0x14] sm:$0xf]
        %v823 = vld [vmem:[%s3 + $0x18] sm:$0xf]
        %v824 = vld [vmem:[%s3 + $0x1c] sm:$0xf]
        %v825 = vld [vmem:[%s3 + $0x20] sm:$0xf]
        %v826 = vld [vmem:[%s3 + $0x24] sm:$0xf]
        %v827 = vld [vmem:[%s3 + $0x28] sm:$0xf]
        %v828 = vld [vmem:[%s3 + $0x2c] sm:$0xf]
        %v829 = vld [vmem:[%s3 + $0x30] sm:$0xf]
        %v830 = vld [vmem:[%s3 + $0x34] sm:$0xf]
        %v831 = vld [vmem:[%s3 + $0x38] sm:$0xf]
        %v832 = vld [vmem:[%s3 + $0x3c] sm:$0xf]
        %v833 = vld [vmem:[%s4] sm:$0x1]
        %v835 = vperm.slane %v833, 0
        %v853 = vunpack.c.l.b16 %v817
        %v854 = vunpack.c.l.b16 %v818
        %v855 = vunpack.c.l.b16 %v819
        %v856 = vunpack.c.l.b16 %v820
        %v857 = vunpack.c.l.b16 %v821
        %v858 = vunpack.c.l.b16 %v822
        %v859 = vunpack.c.l.b16 %v823
        %v860 = vunpack.c.l.b16 %v824
        %v861 = vunpack.c.l.b16 %v825
        %v862 = vunpack.c.l.b16 %v826
        %v863 = vunpack.c.l.b16 %v827
        %v864 = vunpack.c.l.b16 %v828
        %v865 = vunpack.c.l.b16 %v829
        %v866 = vunpack.c.l.b16 %v830
        %v867 = vunpack.c.l.b16 %v831
        %v868 = vunpack.c.l.b16 %v832
        %v869 = vpack.c.b16 %v854, %v853
        %v870 = vpack.c.b16 %v856, %v855
        %v871 = vpack.c.b16 %v858, %v857
        %v872 = vpack.c.b16 %v860, %v859
        %v873 = vpack.c.b16 %v862, %v861
        %v874 = vpack.c.b16 %v864, %v863
        %v875 = vpack.c.b16 %v866, %v865
        %v876 = vpack.c.b16 %v868, %v867
        %885 = vmatpush.bf16.msra.mxu0 %v876
        %886 = vmatpush.bf16.msra.mxu0 %v875
        %887 = vmatpush.bf16.msra.mxu0 %v874
        %888 = vmatpush.bf16.msra.mxu0 %v873
        %889 = vmatpush.bf16.msra.mxu0 %v872
        %890 = vmatpush.bf16.msra.mxu0 %v871
        %891 = vmatpush.bf16.msra.mxu0 %v870
        %892 = vmatpush.bf16.msra.mxu0 %v869
        %893 = vmatmul.bf16.gmra.mxu0 %v801
        %v894 = vpop.f32.mrf.mxu0
        %v895 = vadd.f32 %v835, %v894
        %v896 = vpop.f32.mrf.mxu0
        %v897 = vadd.f32 %v835, %v896
        %898 = vmatmul.bf16.gmra.mxu0 %v802
        %v899 = vpop.f32.mrf.mxu0
        %v900 = vadd.f32 %v835, %v899
        %v901 = vpop.f32.mrf.mxu0
        %v902 = vadd.f32 %v835, %v901
        %903 = vmatmul.bf16.gmra.mxu0 %v803
        %v904 = vpop.f32.mrf.mxu0
        %v905 = vadd.f32 %v835, %v904
        %v906 = vpop.f32.mrf.mxu0
        %v907 = vadd.f32 %v835, %v906
        %908 = vmatmul.bf16.gmra.mxu0 %v804
        %v909 = vpop.f32.mrf.mxu0
        %v910 = vadd.f32 %v835, %v909
        %v911 = vpop.f32.mrf.mxu0
        %v912 = vadd.f32 %v835, %v911
        %913 = vmatmul.bf16.gmra.mxu0 %v805
        %v914 = vpop.f32.mrf.mxu0
        %v915 = vadd.f32 %v835, %v914
        %v916 = vpop.f32.mrf.mxu0
        %v917 = vadd.f32 %v835, %v916
        %918 = vmatmul.bf16.gmra.mxu0 %v806
        %v919 = vpop.f32.mrf.mxu0
        %v920 = vadd.f32 %v835, %v919
        %v921 = vpop.f32.mrf.mxu0
        %v922 = vadd.f32 %v835, %v921
        %923 = vmatmul.bf16.gmra.mxu0 %v807
        %v924 = vpop.f32.mrf.mxu0
        %v925 = vadd.f32 %v835, %v924
        %v926 = vpop.f32.mrf.mxu0
        %v927 = vadd.f32 %v835, %v926
        %928 = vmatmul.bf16.gmra.mxu0 %v808
        %v929 = vpop.f32.mrf.mxu0
        %v930 = vadd.f32 %v835, %v929
        %v931 = vpop.f32.mrf.mxu0
        %v932 = vadd.f32 %v835, %v931
        %933 = vmatmul.bf16.gmra.mxu0 %v809
        %v934 = vpop.f32.mrf.mxu0
        %v935 = vadd.f32 %v835, %v934
        %v936 = vpop.f32.mrf.mxu0
        %v937 = vadd.f32 %v835, %v936
        %938 = vmatmul.bf16.gmra.mxu0 %v810
        %v939 = vpop.f32.mrf.mxu0
        %v940 = vadd.f32 %v835, %v939
        %v941 = vpop.f32.mrf.mxu0
        %v942 = vadd.f32 %v835, %v941
        %943 = vmatmul.bf16.gmra.mxu0 %v811
        %v944 = vpop.f32.mrf.mxu0
        %v945 = vadd.f32 %v835, %v944
        %v946 = vpop.f32.mrf.mxu0
        %v947 = vadd.f32 %v835, %v946
        %948 = vmatmul.bf16.gmra.mxu0 %v812
        %v949 = vpop.f32.mrf.mxu0
        %v950 = vadd.f32 %v835, %v949
        %v951 = vpop.f32.mrf.mxu0
        %v952 = vadd.f32 %v835, %v951
        %953 = vmatmul.bf16.gmra.mxu0 %v813
        %v954 = vpop.f32.mrf.mxu0
        %v955 = vadd.f32 %v835, %v954
        %v956 = vpop.f32.mrf.mxu0
        %v957 = vadd.f32 %v835, %v956
        %958 = vmatmul.bf16.gmra.mxu0 %v814
        %v959 = vpop.f32.mrf.mxu0
        %v960 = vadd.f32 %v835, %v959
        %v961 = vpop.f32.mrf.mxu0
        %v962 = vadd.f32 %v835, %v961
        %963 = vmatmul.bf16.gmra.mxu0 %v815
        %v964 = vpop.f32.mrf.mxu0
        %v965 = vadd.f32 %v835, %v964
        %v966 = vpop.f32.mrf.mxu0
        %v967 = vadd.f32 %v835, %v966
        %968 = vmatmul.bf16.gmra.mxu0 %v816
        %v969 = vpop.f32.mrf.mxu0
        %v970 = vadd.f32 %v835, %v969
        %v971 = vpop.f32.mrf.mxu0
        %v972 = vadd.f32 %v835, %v971
        %973 = vdwg.mxu0
        %vm974 = vcmask 64512
        %975 = vst.msk [vmem:[%s265] sm:$0xff] %vm974, %v895
        %976 = vst.msk [vmem:[%s265 + $0x8] sm:$0xff] %vm974, %v897
        %977 = vst.msk [vmem:[%s265 + $0x10] sm:$0xff] %vm974, %v900
        %978 = vst.msk [vmem:[%s265 + $0x18] sm:$0xff] %vm974, %v902
        %979 = vst.msk [vmem:[%s265 + $0x20] sm:$0xff] %vm974, %v905
        %980 = vst.msk [vmem:[%s265 + $0x28] sm:$0xff] %vm974, %v907
        %981 = vst.msk [vmem:[%s265 + $0x30] sm:$0xff] %vm974, %v910
        %982 = vst.msk [vmem:[%s265 + $0x38] sm:$0xff] %vm974, %v912
        %983 = vst.msk [vmem:[%s265 + $0x40] sm:$0xff] %vm974, %v915
        %984 = vst.msk [vmem:[%s265 + $0x48] sm:$0xff] %vm974, %v917
        %985 = vst.msk [vmem:[%s265 + $0x50] sm:$0xff] %vm974, %v920
        %986 = vst.msk [vmem:[%s265 + $0x58] sm:$0xff] %vm974, %v922
        %987 = vst.msk [vmem:[%s265 + $0x60] sm:$0xff] %vm974, %v925
        %988 = vst.msk [vmem:[%s265 + $0x68] sm:$0xff] %vm974, %v927
        %989 = vst.msk [vmem:[%s265 + $0x70] sm:$0xff] %vm974, %v930
        %990 = vst.msk [vmem:[%s265 + $0x78] sm:$0xff] %vm974, %v932
        %991 = vst.msk [vmem:[%s265 + $0x80] sm:$0xff] %vm974, %v935
        %992 = vst.msk [vmem:[%s265 + $0x88] sm:$0xff] %vm974, %v937
        %993 = vst.msk [vmem:[%s265 + $0x90] sm:$0xff] %vm974, %v940
        %994 = vst.msk [vmem:[%s265 + $0x98] sm:$0xff] %vm974, %v942
        %995 = vst.msk [vmem:[%s265 + $0xa0] sm:$0xff] %vm974, %v945
        %996 = vst.msk [vmem:[%s265 + $0xa8] sm:$0xff] %vm974, %v947
        %997 = vst.msk [vmem:[%s265 + $0xb0] sm:$0xff] %vm974, %v950
        %998 = vst.msk [vmem:[%s265 + $0xb8] sm:$0xff] %vm974, %v952
        %999 = vst.msk [vmem:[%s265 + $0xc0] sm:$0xff] %vm974, %v955
        %1000 = vst.msk [vmem:[%s265 + $0xc8] sm:$0xff] %vm974, %v957
        %1001 = vst.msk [vmem:[%s265 + $0xd0] sm:$0xff] %vm974, %v960
        %1002 = vst.msk [vmem:[%s265 + $0xd8] sm:$0xff] %vm974, %v962
        %1003 = vst.msk [vmem:[%s265 + $0xe0] sm:$0xff] %vm974, %v965
        %1004 = vst.msk [vmem:[%s265 + $0xe8] sm:$0xff] %vm974, %v967
        %1005 = vst.msk [vmem:[%s265 + $0xf0] sm:$0xff] %vm974, %v970
        %1006 = vst.msk [vmem:[%s265 + $0xf8] sm:$0xff] %vm974, %v972
        %s1007 = smul.u32 32, %s20
        %p1008 = scmp.lt.s32.totalorder %s1007, 63
        %s1009 = scalar_select %p1008, %s1007, 63
        %s1010 = smul.addr %s1009, 8
        %s1011 = scalar_lea.vmem %s5, %s1010
        // Predicated region
        $region49: #{tpu_custom_call.1} parent=39 // pred_check
          %p1012 = pneg %p148
        $region50: #{tpu_custom_call.1} parent=39 // pred_check_branch
          %1014 = sbr.rel (%p1012) target = $region52
        $region51: #{tpu_custom_call.1} parent=39 // pred_region
          %s1015 = smul.u32 32, %s20
        $region52: #{tpu_custom_call.1} parent=39 // pred_fallthru
          _
      $region40: #{tpu_custom_call.1} parent=5 // pred_fallthru
        _
      %p1016 = scmp.le.s32.totalorder 2, %s15
      // Predicated region
      $region53: #{tpu_custom_call.1} parent=5 // pred_check
        %p1017 = pneg %p1016
      $region54: #{tpu_custom_call.1} parent=5 // pred_check_branch
        %1019 = sbr.rel (%p1017) target = $region56
      $region55: #{tpu_custom_call.1} parent=5 // pred_region
        %s1020 = ssub.s32 %s15, 2
        // Predicated region
        $region57: #{tpu_custom_call.1} parent=55 // pred_check
          %p1021 = pneg %p154
        $region58: #{tpu_custom_call.1} parent=55 // pred_check_branch
          %1023 = sbr.rel (%p1021) target = $region60
        $region59: #{tpu_custom_call.1} parent=55 // pred_region
          %s1024 = smul.u32 32, %s21
          %p1025 = scmp.lt.s32.totalorder %s1024, 63
          %s1026 = scalar_select %p1025, %s1024, 63
          %s1027 = smul.addr %s1026, 8
          %s1028 = scalar_lea.vmem %s5, %s1027
        $region60: #{tpu_custom_call.1} parent=55 // pred_fallthru
          _
      $region56: #{tpu_custom_call.1} parent=5 // pred_fallthru
        _
    $region6: #{tpu_custom_call.1} parent=1 // loop_footer
      %s19 = sadd.s32 1, %s15
    $region7: #{tpu_custom_call.1} parent=1 // loop_footer_branch
      %14 = sbr.rel target = $region3
    $region8: #{tpu_custom_call.1} parent=1 // loop_exit
      _
    %1029 = vsyncpa [#allocation3], 1
    %s1030 = scalar_lea.sflag [#allocation3], 1
    %1031 = vsyncpa %s1030, 1
    %1032 = vsyncpa [#allocation5], 1

</llo_original>
